<compile_context>
chip_gen: v5e
topology: v5e:2x2
jax: 0.10.0
libtpu: 0.0.40
codegen_flags: <defaults>
</compile_context>

<pallas_src>
import math

import jax
import jax.numpy as jnp
import numpy as np
from jax.experimental import pallas as pl
from jax.experimental.pallas import tpu as pltpu


# ----------------------------------------------------------------------------- kernel
def _affine_kernel(u_ref, scale_ref, shift_ref, x_ref):
    # Pure streamed FMA; (1, TC) scale/shift broadcast across the (TR, TC) block.
    u = u_ref[...].astype(scale_ref.dtype)
    x_ref[...] = (u * scale_ref[...] + shift_ref[...]).astype(x_ref.dtype)


# ----------------------------------------------------------------------------- helpers
def _round_up(x, m):
    return ((x + m - 1) // m) * m


def _round_down(x, m):
    return (x // m) * m


def _vmem_capacity_bytes():
    try:
        return int(pltpu.get_tpu_info().vmem_capacity_bytes)
    except Exception:
        return 64 * 1024 * 1024  # conservative (v7x per-TensorCore VMEM)


def _bf16_valu_native():
    """True on generations with a native bf16 VALU (v6e, v7x)."""
    try:
        kind = jax.devices()[0].device_kind.lower()
    except Exception:
        return False
    if "tpu" not in kind:
        return False
    return not any(old in kind for old in ("v2", "v3", "v4", "v5"))


def _streamed_affine(u2, scale_row, shift_row, out_dtype):
    """x2 = u2 * scale_row + shift_row, streamed through VMEM.

    u2:        [R, C] (C a multiple of 128), streamed in its native dtype.
    scale_row: [1, C] compute-dtype (resident in VMEM).
    shift_row: [1, C] compute-dtype (resident in VMEM).
    """
    R, C = u2.shape
    itemsize = jnp.dtype(u2.dtype).itemsize
    # Sublane rows for the streamed dtype: 8 for 32-bit, 16 for bf16/fp16.
    sub = 8 if itemsize >= 4 else 8 * (4 // itemsize)

    # ~1.5 MiB per (TR, TC) tile: streaming kernels are already ~85% of the HBM
    # roofline there, and the double-buffered in+out resident set (~6 MiB)
    # leaves plenty of headroom even on v7x's 64 MiB VMEM.
    max_tile_bytes = 1536 * 1024

    # Lane-axis tiling: single lane block unless even a `sub`-row strip of C
    # would blow the tile budget (very wide D guard).
    if sub * C * itemsize <= max_tile_bytes:
        tc = C
    else:
        tc = min(C, max(128, _round_down(max_tile_bytes // (sub * itemsize), 128)))

    # Row-axis tiling: sublane-aligned, and at least 2 row steps when there is
    # enough work so v7x's two TensorCores both get blocks.
    rows_budget = max(sub, _round_down(max_tile_bytes // (tc * itemsize), sub))
    if R >= 2 * sub:
        half = max(sub, _round_down((R + 1) // 2, sub))
        tr = min(rows_budget, half)
    else:
        tr = min(R, rows_budget)  # tiny R: a single full-extent block is legal

    grid = (pl.cdiv(R, tr), pl.cdiv(C, tc))

    vmem_cap = _vmem_capacity_bytes()
    vmem_limit = int(min(vmem_cap // 2, 64 * 1024 * 1024))

    return pl.pallas_call(
        _affine_kernel,
        out_shape=jax.ShapeDtypeStruct((R, C), out_dtype),
        grid=grid,
        in_specs=[
            pl.BlockSpec((tr, tc), lambda i, j: (i, j)),   # u rows, streamed
            pl.BlockSpec((1, tc), lambda i, j: (0, j)),    # scale (resident)
            pl.BlockSpec((1, tc), lambda i, j: (0, j)),    # shift (resident)
        ],
        out_specs=pl.BlockSpec((tr, tc), lambda i, j: (i, j)),
        compiler_params=pltpu.CompilerParams(
            dimension_semantics=("parallel", "parallel"),  # megacore on v7x
            vmem_limit_bytes=vmem_limit,
        ),
    )(u2, scale_row, shift_row)


# ----------------------------------------------------------------------------- forward
def causal_af_forward(u, un_s, t, nodes, slope=0.001, *, min_pallas_elems=65536):
    """Pallas implementation of CausalAFLayer.forward.

    u     : [B, D] float (streamed in its native dtype)
    un_s  : [len(nodes)] float parameter
    t     : [len(nodes)] float parameter
    nodes : list[int] feature indices to transform
    Returns (x [B, D] in u.dtype, logd [B] float32).
    """
    B, D = u.shape
    out_dtype = u.dtype
    nodes_arr = jnp.asarray(nodes, dtype=jnp.int32)

    # ---- parameter-only math (tiny, length-|nodes|): hoisted out of the kernel.
    log_slope = math.log(slope)
    uns32 = un_s.astype(jnp.float32)
    logs = uns32 / (1.0 + jnp.abs(uns32 / log_slope))
    logd = jnp.broadcast_to(jnp.sum(logs), (B,))

    # bf16-native FMA on v6e/v7x; f32 upcast on v5e and older (no bf16 VALU).
    if out_dtype == jnp.bfloat16 and _bf16_valu_native():
        compute_dtype = jnp.bfloat16
    else:
        compute_dtype = jnp.float32

    # Dense per-feature scale/shift with identity values off-nodes.
    # TODO(synk): if nodes/un_s/t are static across many flow steps, precompute
    # these slabs once and pass them in instead of scattering per call.
    scale_d = jnp.ones((D,), compute_dtype).at[nodes_arr].set(
        jnp.exp(logs).astype(compute_dtype))
    shift_d = jnp.zeros((D,), compute_dtype).at[nodes_arr].set(
        t.astype(compute_dtype))

    # ---- tiny problems: fixed pallas_call overhead dominates; fused JAX FMA.
    if B * D < min_pallas_elems:
        x = (u.astype(compute_dtype) * scale_d[None, :] + shift_d[None, :]).astype(out_dtype)
        return x, logd

    # ---- lane folding: view [B, D] as [R, L] (free row-major reshape) so the
    # last dim is a multiple of 128 without padding D; scale/shift tiled F
    # times so the per-column pattern stays correct.
    L = (D * 128) // math.gcd(D, 128)
    F = L // D
    if B % F != 0:
        # Ragged batch for the fold: pad rows only (cheap axis; at most F-1 rows
        # of extra traffic).  Never triggers when D % 128 == 0 (F == 1).
        B_pad = _round_up(B, F)
        u_in = jnp.pad(u, ((0, B_pad - B), (0, 0)))
    else:
        B_pad = B
        u_in = u

    R = B_pad // F
    u2 = u_in.reshape(R, L)                       # row-major reshape: no data movement
    scale_row = jnp.tile(scale_d, (F,)).reshape(1, L)
    shift_row = jnp.tile(shift_d, (F,)).reshape(1, L)

    x2 = _streamed_affine(u2, scale_row, shift_row, out_dtype)
    x = x2.reshape(B_pad, D)
    if B_pad != B:
        x = x[:B]
    return x, logd


# ----------------------------------------------------------------------------- reference
def causal_af_forward_ref(u, un_s, t, nodes, slope=0.001):
    """Pure-JAX (f32) reference mirroring the PyTorch forward."""
    nodes_arr = jnp.asarray(nodes, dtype=jnp.int32)
    u32 = u.astype(jnp.float32)
    uns32 = un_s.astype(jnp.float32)
    logs = uns32 / (1.0 + jnp.abs(uns32 / math.log(slope)))
    x = u32.at[:, nodes_arr].set(u32[:, nodes_arr] * jnp.exp(logs) + t.astype(jnp.float32))
    logd = jnp.broadcast_to(jnp.sum(logs), (u.shape[0],))
    return x, logd


# ----------------------------------------------------------------------------- test
if __name__ == "__main__":
    key = jax.random.PRNGKey(0)
    nodes = [1, 3, 4, 7, 12]

    def run_case(B, D, dtype, min_pallas_elems, tol):
        k_u, k_s, k_t = jax.random.split(jax.random.fold_in(key, B * 131 + D), 3)
        u = jax.random.normal(k_u, (B, D), dtype=jnp.float32).astype(dtype)
        un_s = 0.1 * jax.random.normal(k_s, (len(nodes),), dtype=jnp.float32)
        t = 0.1 * jax.random.normal(k_t, (len(nodes),), dtype=jnp.float32)

        x, logd = causal_af_forward(u, un_s, t, nodes,
                                    min_pallas_elems=min_pallas_elems)
        x = jax.block_until_ready(x)
        logd = jax.block_until_ready(logd)

        x_ref, logd_ref = causal_af_forward_ref(u, un_s, t, nodes)
        assert x.shape == (B, D) and x.dtype == dtype and logd.shape == (B,)
        np.testing.assert_allclose(np.asarray(x, dtype=np.float32),
                                   np.asarray(x_ref), rtol=tol, atol=tol)
        np.testing.assert_allclose(np.asarray(logd), np.asarray(logd_ref),
                                   rtol=1e-6, atol=1e-6)

    # Pallas path, lane-folded (D=16 -> L=128, fold factor 8), forced on.
    run_case(16, 16, jnp.float32, 0, 1e-6)
    # Pallas path, already lane-dense D (no fold), multi-step row grid.
    run_case(32, 128, jnp.float32, 0, 1e-6)
    # Pallas path, bf16 streaming (bf16 FMA on v6e/v7x, f32 upcast on v5e).
    run_case(16, 128, jnp.bfloat16, 0, 5e-2)
    # Tiny-problem pure-JAX fallback (pallas_call overhead would dominate).
    run_case(4, 16, jnp.float32, 65536, 1e-6)

    print("KERNEL_OK")
</pallas_src>

<mosaic_0001>
module attributes {stable_mosaic.version = 11 : i64} {
  func.func @_affine_kernel(%arg0: i32, %arg1: i32, %arg2: memref<2x128xf32, #tpu.memory_space<vmem>>, %arg3: memref<1x128xf32, #tpu.memory_space<vmem>>, %arg4: memref<1x128xf32, #tpu.memory_space<vmem>>, %arg5: memref<2x128xf32, #tpu.memory_space<vmem>>) attributes {dimension_semantics = [#tpu.dimension_semantics<parallel>, #tpu.dimension_semantics<parallel>], iteration_bounds = array<i64: 1, 1>, scalar_prefetch = 0 : i64, scratch_operands = 0 : i64, tpu.core_type = #tpu.core_type<tc>, window_params = [{transform_indices = @transform_0, window_bounds = array<i64: 2, 128>}, {transform_indices = @transform_1, window_bounds = array<i64: 1, 128>}, {transform_indices = @transform_2, window_bounds = array<i64: 1, 128>}, {transform_indices = @transform_3, window_bounds = array<i64: 2, 128>}]} {
    %c0 = arith.constant 0 : index
    %c0_0 = arith.constant 0 : index
    %0 = vector.load %arg2[%c0, %c0_0] : memref<2x128xf32, #tpu.memory_space<vmem>>, vector<2x128xf32>
    %c0_1 = arith.constant 0 : index
    %c0_2 = arith.constant 0 : index
    %1 = vector.load %arg3[%c0_1, %c0_2] : memref<1x128xf32, #tpu.memory_space<vmem>>, vector<1x128xf32>
    %2 = vector.broadcast %1 : vector<1x128xf32> to vector<2x128xf32>
    %3 = arith.mulf %0, %2 : vector<2x128xf32>
    %c0_3 = arith.constant 0 : index
    %c0_4 = arith.constant 0 : index
    %4 = vector.load %arg4[%c0_3, %c0_4] : memref<1x128xf32, #tpu.memory_space<vmem>>, vector<1x128xf32>
    %5 = vector.broadcast %4 : vector<1x128xf32> to vector<2x128xf32>
    %6 = arith.addf %3, %5 : vector<2x128xf32>
    %c0_5 = arith.constant 0 : index
    %c0_6 = arith.constant 0 : index
    %7 = vector.load %arg5[%c0_5, %c0_6] : memref<2x128xf32, #tpu.memory_space<vmem>>, vector<2x128xf32>
    tpu.vector_store %arg5[%c0_5, %c0_6], %6 {strides = array<i32>} : memref<2x128xf32, #tpu.memory_space<vmem>>, vector<2x128xf32>,
    return
  }
  func.func @transform_0(%arg0: i32, %arg1: i32) -> (i32, i32) {
    %c0_i32 = arith.constant 0 : i32
    return %arg0, %arg1 : i32, i32
  }
  func.func @transform_1(%arg0: i32, %arg1: i32) -> (i32, i32) {
    %c0_i32 = arith.constant 0 : i32
    %c0_i32_0 = arith.constant 0 : i32
    return %c0_i32, %arg1 : i32, i32
  }
  func.func @transform_2(%arg0: i32, %arg1: i32) -> (i32, i32) {
    %c0_i32 = arith.constant 0 : i32
    %c0_i32_0 = arith.constant 0 : i32
    return %c0_i32, %arg1 : i32, i32
  }
  func.func @transform_3(%arg0: i32, %arg1: i32) -> (i32, i32) {
    %c0_i32 = arith.constant 0 : i32
    return %arg0, %arg1 : i32, i32
  }
}

</mosaic_0001>

<llo_original>
// kernel: tpu_custom_call.1
$region0: #{tpu_custom_call.1}
  #allocation0 [shape = 'u32[]', space=smem, size = 0x4, offset = 0x4, fixed_abs, tag = 'smem constant byte address 0x4 - core index']
  #allocation1 [shape = 'u32[72,128]{1,0:T(1,128)}', space=vmem, size = 0x9000, scoped, tag = 'internal scratch']
  %s0 = inlined_call_operand.hbm [shape: f32[2,128], index: 0, kind: input, shape index: {}]
  %s1 = inlined_call_operand.hbm [shape: f32[1,128], index: 1, kind: input, shape index: {}]
  %s2 = inlined_call_operand.vmem [shape: f32[1,128], index: 2, kind: input, shape index: {}]
  %s3 = inlined_call_operand.hbm [shape: f32[2,128], index: 3, kind: output, shape index: {}]
  %s4 = sld [smem:[#allocation0]]
  $region30: #{tpu_custom_call.1} parent=0
    _
  %s6 = ssub.s32 1, %s4
  %s7 = scalar_select 0, %s6, %s4
  $region1: #{tpu_custom_call.1} parent=0
    #allocation2 [shape = 'u8[1024]{0}', space=vmem, size = 0x400, scoped, tag = 'input window, operand 0, single buffered']
    #allocation3 [shape = 's32[1]{0}', space=sflag, size = 0x4, scoped, tag = 'scoped memory for tpu_custom_call.1']
    #allocation4 [shape = 's32[1]{0}', space=sflag, size = 0x4, scoped, tag = 'scoped memory for tpu_custom_call.1']
    #allocation5 [shape = 'u8[512]{0}', space=vmem, size = 0x400, scoped, tag = 'input window, operand 1, single buffered']
    #allocation6 [shape = 's32[1]{0}', space=sflag, size = 0x4, scoped, tag = 'scoped memory for tpu_custom_call.1']
    #allocation7 [shape = 'u8[1024]{0}', space=vmem, size = 0x400, scoped, tag = 'output window, operand 0, single buffered']
    %8 = vsyncpa [#allocation3], 0
    %9 = vsyncpa [#allocation6], 0
    %10 = vsyncpa [#allocation4], 0
    // Predicated region
    $region2: #{tpu_custom_call.1} parent=1 // pred_check
      _
    $region3: #{tpu_custom_call.1} parent=1 // pred_check_branch
      %12 = sbr.rel (0) target = $region5
    $region4: #{tpu_custom_call.1} parent=1 // pred_region
      %14 = vsyncadd [#allocation3], 0
      %s16 = sshll.u32 %s0, 4
      %s17 = int_to_ptr.hbm [resolvable:$true] %s16
      %s18 = sshll.u32 [#allocation2], 4
      %s19 = int_to_ptr.vmem [resolvable:$true] %s18
      %21 = dma.hbm_to_vmem [thread:$0]  %s17, 32, %s19, [#allocation3]
    $region5: #{tpu_custom_call.1} parent=1 // pred_fallthru
      _
    // Predicated region
    $region6: #{tpu_custom_call.1} parent=1 // pred_check
      _
    $region7: #{tpu_custom_call.1} parent=1 // pred_check_branch
      %23 = sbr.rel (0) target = $region9
    $region8: #{tpu_custom_call.1} parent=1 // pred_region
      %25 = vsyncadd [#allocation6], 0
      %s27 = sshll.u32 %s1, 4
      %s28 = int_to_ptr.hbm [resolvable:$true] %s27
      %s29 = sshll.u32 [#allocation5], 4
      %s30 = int_to_ptr.vmem [resolvable:$true] %s29
      %32 = dma.hbm_to_vmem [thread:$0]  %s28, 16, %s30, [#allocation6]
    $region9: #{tpu_custom_call.1} parent=1 // pred_fallthru
      _
    // Predicated region
    $region10: #{tpu_custom_call.1} parent=1 // pred_check
      _
    $region11: #{tpu_custom_call.1} parent=1 // pred_check_branch
      %34 = sbr.rel (0) target = $region13
    $region12: #{tpu_custom_call.1} parent=1 // pred_region
      _
    $region13: #{tpu_custom_call.1} parent=1 // pred_fallthru
      _
    // Predicated region
    $region14: #{tpu_custom_call.1} parent=1 // pred_check
      _
    $region15: #{tpu_custom_call.1} parent=1 // pred_check_branch
      %36 = sbr.rel (0) target = $region17
    $region16: #{tpu_custom_call.1} parent=1 // pred_region
      %38 = dma.done [#allocation3], 32
    $region17: #{tpu_custom_call.1} parent=1 // pred_fallthru
      _
    // Predicated region
    $region18: #{tpu_custom_call.1} parent=1 // pred_check
      _
    $region19: #{tpu_custom_call.1} parent=1 // pred_check_branch
      %40 = sbr.rel (0) target = $region21
    $region20: #{tpu_custom_call.1} parent=1 // pred_region
      %42 = dma.done [#allocation6], 16
    $region21: #{tpu_custom_call.1} parent=1 // pred_fallthru
      _
    %v43 = vld [vmem:[#allocation2] sm:$0x3]
    %v44 = vld [vmem:[#allocation5] sm:$0x1]
    %v46 = vperm.slane %v44, 0
    %v48 = vmul.f32 %v43, %v46
    %v49 = vld [vmem:[%s2] sm:$0x1]
    %v51 = vperm.slane %v49, 0
    %v53 = vadd.f32 %v48, %v51
    %54 = vst [vmem:[#allocation7] sm:$0x3] %v53
    // Predicated region
    $region22: #{tpu_custom_call.1} parent=1 // pred_check
      _
    $region23: #{tpu_custom_call.1} parent=1 // pred_check_branch
      %56 = sbr.rel (0) target = $region25
    $region24: #{tpu_custom_call.1} parent=1 // pred_region
      %58 = vsyncadd [#allocation4], 0
      %s60 = sshll.u32 [#allocation7], 4
      %s61 = int_to_ptr.vmem [resolvable:$true] %s60
      %s62 = sshll.u32 %s3, 4
      %s63 = int_to_ptr.hbm [resolvable:$true] %s62
      %65 = dma.vmem_to_hbm [thread:$0]  %s61, 32, %s63, [#allocation4]
    $region25: #{tpu_custom_call.1} parent=1 // pred_fallthru
      _
    // Predicated region
    $region26: #{tpu_custom_call.1} parent=1 // pred_check
      _
    $region27: #{tpu_custom_call.1} parent=1 // pred_check_branch
      %67 = sbr.rel (0) target = $region29
    $region28: #{tpu_custom_call.1} parent=1 // pred_region
      %69 = dma.done [#allocation4], 32
    $region29: #{tpu_custom_call.1} parent=1 // pred_fallthru
      _
    %70 = vsyncpa [#allocation3], 1
    %71 = vsyncpa [#allocation6], 1
    %72 = vsyncpa [#allocation4], 1

</llo_original>
